<compile_context>
chip_gen: v6e
topology: v6e:2x2x1
jax: 0.10.0
libtpu: 0.0.40
codegen_flags: <defaults>
</compile_context>

<pallas_src>
import functools

import numpy as np
import jax
import jax.numpy as jnp
from jax.experimental import pallas as pl
from jax.experimental.pallas import tpu as pltpu


# ----------------------------------------------------------------------------
# Fused Pallas kernel: GAT(edges1) -> GAT(edges2) -> gather(idx_mapping)
# ----------------------------------------------------------------------------
def ontology_gat_kernel(x_ref, wext_ref, bias_ref, mb1_ref, mb2_ref,
                        hmask_ref, seg_ref, sel_ref, o_ref, *,
                        heads, C, neg_slope):
    HC = heads * C
    N = x_ref.shape[0]

    # Constants shared by both layers: load once.
    w_ext = wext_ref[...]            # [Fin, HC + 2H]  = [W | W@adst | W@asrc]
    bias = bias_ref[...]             # [1, HC]
    hmask = hmask_ref[...]           # [H, HC]   ones on each head's column block
    seg = seg_ref[...]               # [H*N, H]  ones at [h*N+j, h] (denominator columns)

    def gat_layer(x, mask_bias_cat):
        # One fused MXU matmul produces [h | e_dst | e_src].
        h_ext = jnp.dot(x, w_ext, preferred_element_type=jnp.float32)   # [N, HC+2H]
        h = h_ext[:, :HC]                                               # [N, HC]
        e_dst = h_ext[:, HC:HC + heads]                                 # [N, H]
        e_src_t = h_ext[:, HC + heads:HC + 2 * heads].T                 # [H, N]

        # Per-head scores concatenated along lanes: s_cat[i, hh*N + j].
        s_cat = jnp.concatenate(
            [e_dst[:, hh:hh + 1] + e_src_t[hh:hh + 1, :] for hh in range(heads)],
            axis=1)                                                     # [N, H*N]
        s_cat = jnp.maximum(s_cat, neg_slope * s_cat)                   # LeakyReLU
        s_cat = s_cat + mask_bias_cat                                   # -1e9 on non-edges
        # Per-dst-row max (shared across heads) - softmax is invariant to any
        # per-row constant; self-loops keep the max finite.
        s_cat = s_cat - jnp.max(s_cat, axis=-1, keepdims=True)
        p_cat = jnp.exp(s_cat)                                          # masked -> exactly 0

        # Block-diagonalized features so ONE MXU dot does all heads, and the
        # per-head softmax denominators ride along as H extra columns.
        h_bd = (h[None, :, :] * hmask[:, None, :]).reshape(heads * N, HC)   # [H*N, HC]
        rhs = jnp.concatenate([h_bd, seg], axis=1)                           # [H*N, HC+H]
        agg_den = jnp.dot(p_cat, rhs, preferred_element_type=jnp.float32)    # [N, HC+H]
        agg = agg_den[:, :HC]                                                # unnormalized
        denom = agg_den[:, HC:]                                              # [N, H], > 0 (self-loops)

        inv = pl.reciprocal(denom, approx=True)                         # EUP slot
        inv = inv * (2.0 - denom * inv)                                 # Newton refine -> fp32 accuracy
        scale = jnp.dot(inv, hmask, preferred_element_type=jnp.float32)  # [N, HC] per-head 1/denom
        # Deferred normalization + single full-width bias add (rows of alpha sum to 1).
        return agg * scale + bias

    h1 = gat_layer(x_ref[...], mb1_ref[...])          # layer 1 (lives in vregs)
    h2 = gat_layer(h1, mb2_ref[...])                  # layer 2 (lives in vregs)
    # Fused idx_mapping gather as a one-hot [V, N] matmul; single lane-dense store.
    o_ref[...] = jnp.dot(sel_ref[...], h2, preferred_element_type=jnp.float32)


def ontology_embedding_forward(embedding, w_ext, bias2d, mb1_cat, mb2_cat,
                               hmask, seg, sel, *, heads, out_channels,
                               neg_slope=0.2):
    """Single pallas_call for emb -> GAT(e1) -> GAT(e2) -> gather(idx_mapping)."""
    hc = heads * out_channels
    v = sel.shape[0]
    kern = functools.partial(ontology_gat_kernel, heads=heads, C=out_channels,
                             neg_slope=neg_slope)
    vmem = pl.BlockSpec(memory_space=pltpu.MemorySpace.VMEM)
    return pl.pallas_call(
        kern,
        out_shape=jax.ShapeDtypeStruct((v, hc), jnp.float32),
        in_specs=[vmem] * 8,
        out_specs=vmem,
    )(embedding, w_ext, bias2d, mb1_cat, mb2_cat, hmask, seg, sel)


# ----------------------------------------------------------------------------
# One-time host-side parameter packing (done at module setup, outside the jit)
# ----------------------------------------------------------------------------
def prepare_ontology_inputs(W, att, bias, mask1, mask2, idx_mapping,
                            n_nodes, heads, out_channels):
    C = out_channels
    HC = heads * C
    N = n_nodes
    W = np.asarray(W, np.float32)                       # [Fin, HC]
    att = np.asarray(att, np.float32)                   # [1, H, 2C]
    a_dst = att[0, :, :C]                               # dst (x_i) half
    a_src = att[0, :, C:]                               # src (x_j) half

    adst_mat = np.zeros((HC, heads), np.float32)
    asrc_mat = np.zeros((HC, heads), np.float32)
    for h in range(heads):
        adst_mat[h * C:(h + 1) * C, h] = a_dst[h]
        asrc_mat[h * C:(h + 1) * C, h] = a_src[h]

    # Fold attention projections into the weight matrix: [Fin, HC + 2H]
    w_ext = np.concatenate([W, W @ adst_mat, W @ asrc_mat], axis=1)

    # Additive mask bias: 0 on edges (incl. self-loops), -1e9 elsewhere.
    # Tiled H times along lanes to match the [N, H*N] score layout.
    mb1 = (np.asarray(mask1, np.float32) - 1.0) * 1e9
    mb2 = (np.asarray(mask2, np.float32) - 1.0) * 1e9
    mb1_cat = np.tile(mb1, (1, heads))                  # [N, H*N]
    mb2_cat = np.tile(mb2, (1, heads))

    # Head column-block selector [H, HC] and per-head denominator columns [H*N, H].
    head_mask = np.zeros((heads, HC), np.float32)
    seg_ones = np.zeros((heads * N, heads), np.float32)
    for h in range(heads):
        head_mask[h, h * C:(h + 1) * C] = 1.0
        seg_ones[h * N:(h + 1) * N, h] = 1.0

    # One-hot gather matrix for idx_mapping.
    idx = np.asarray(idx_mapping, np.int32)
    sel = np.zeros((idx.shape[0], N), np.float32)
    sel[np.arange(idx.shape[0]), idx] = 1.0

    bias2d = np.asarray(bias, np.float32).reshape(1, HC)

    return tuple(jnp.asarray(a) for a in
                 (w_ext, bias2d, mb1_cat, mb2_cat, head_mask, seg_ones, sel))


# ----------------------------------------------------------------------------
# Pure-JAX edge-list reference (mirrors the PyTorch/PyG semantics) for checking
# ----------------------------------------------------------------------------
def gat_ref(x, W, att, bias, edge_index, n, heads, C, slope=0.2):
    self_loops = jnp.stack([jnp.arange(n), jnp.arange(n)]).astype(edge_index.dtype)
    ei = jnp.concatenate([edge_index, self_loops], axis=1)
    dst, src = ei[0], ei[1]
    h = (x @ W).reshape(n, heads, C)
    x_i, x_j = h[dst], h[src]
    a = att.reshape(1, heads, 2 * C)
    alpha = (jnp.concatenate([x_i, x_j], axis=-1) * a).sum(-1)            # [E, H]
    alpha = jnp.where(alpha >= 0, alpha, slope * alpha)
    m = jnp.full((n, heads), -jnp.inf).at[dst].max(alpha)
    ex = jnp.exp(alpha - m[dst])
    denom = jnp.zeros((n, heads)).at[dst].add(ex)
    alpha = ex / denom[dst]
    out = jnp.zeros((n, heads, C)).at[dst].add(x_j * alpha[..., None])
    return out.reshape(n, heads * C) + bias


# ----------------------------------------------------------------------------
# Deterministic synthetic setup (build_tree_func stand-in)
# ----------------------------------------------------------------------------
def glorot(key, shape):
    std = np.sqrt(6.0 / (shape[-2] + shape[-1]))
    return jax.random.uniform(key, shape, jnp.float32, -std, std)


def make_edges(key, n, p=0.2):
    adj = np.asarray((jax.random.uniform(key, (n, n)) < p), np.float32)
    np.fill_diagonal(adj, 0.0)
    dst, src = np.nonzero(adj)
    edge_index = np.stack([dst, src]).astype(np.int32)          # [2, E]
    mask = adj + np.eye(n, dtype=np.float32)                    # add_self_loops
    return edge_index, mask


if __name__ == "__main__":
    V = 8                    # voc size (rows returned by forward)
    N_NODES = 24             # graph_voc size (ontology nodes incl. ancestors)
    HEADS = 4
    OUT_CH = 8
    IN_CH = HEADS * OUT_CH   # 32, matches the assert in the module

    key = jax.random.PRNGKey(0)
    k_emb, k_w, k_att, k_e1, k_e2, k_map = jax.random.split(key, 6)

    embedding = glorot(k_emb, (N_NODES, IN_CH))                 # nn.Parameter(num_nodes, in)
    W = glorot(k_w, (IN_CH, HEADS * OUT_CH))                    # GATConv.weight
    att = glorot(k_att, (1, HEADS, 2 * OUT_CH))                 # GATConv.att
    bias = jnp.zeros((HEADS * OUT_CH,), jnp.float32)            # GATConv.bias (zeros init)

    ei1, mask1 = make_edges(k_e1, N_NODES)                      # stage-one edges
    ei2, mask2 = make_edges(k_e2, N_NODES)                      # stage-two edges
    idx_mapping = np.asarray(
        jax.random.choice(k_map, N_NODES, (V,), replace=False), np.int32)

    # One-time host-side packing, then a jitted forward with a single kernel.
    (w_ext, bias2d, mb1_cat, mb2_cat, hmask, seg, sel) = prepare_ontology_inputs(
        W, att, bias, mask1, mask2, idx_mapping, N_NODES, HEADS, OUT_CH)
    fwd = jax.jit(functools.partial(ontology_embedding_forward,
                                    heads=HEADS, out_channels=OUT_CH))

    out = fwd(embedding, w_ext, bias2d, mb1_cat, mb2_cat, hmask, seg, sel)
    out = jax.block_until_ready(out)

    # verify against the edge-list (PyG-style) reference
    r1 = gat_ref(embedding, W, att, bias, jnp.asarray(ei1), N_NODES, HEADS, OUT_CH)
    r2 = gat_ref(r1, W, att, bias, jnp.asarray(ei2), N_NODES, HEADS, OUT_CH)
    ref = r2[jnp.asarray(idx_mapping)]
    np.testing.assert_allclose(np.asarray(out), np.asarray(ref), rtol=2e-4, atol=2e-4)

    print("KERNEL_OK")
</pallas_src>

<mosaic_0001>
module attributes {stable_mosaic.version = 11 : i64} {
  func.func @ontology_gat_kernel(%arg0: memref<24x32xf32, #tpu.memory_space<vmem>>, %arg1: memref<32x40xf32, #tpu.memory_space<vmem>>, %arg2: memref<1x32xf32, #tpu.memory_space<vmem>>, %arg3: memref<24x96xf32, #tpu.memory_space<vmem>>, %arg4: memref<24x96xf32, #tpu.memory_space<vmem>>, %arg5: memref<4x32xf32, #tpu.memory_space<vmem>>, %arg6: memref<96x4xf32, #tpu.memory_space<vmem>>, %arg7: memref<8x24xf32, #tpu.memory_space<vmem>>, %arg8: memref<8x32xf32, #tpu.memory_space<vmem>>) attributes {dimension_semantics = [], scalar_prefetch = 0 : i64, scratch_operands = 0 : i64, tpu.core_type = #tpu.core_type<tc>} {
    %c0 = arith.constant 0 : index
    %c0_0 = arith.constant 0 : index
    %0 = vector.load %arg1[%c0, %c0_0] : memref<32x40xf32, #tpu.memory_space<vmem>>, vector<32x40xf32>
    %c0_1 = arith.constant 0 : index
    %c0_2 = arith.constant 0 : index
    %1 = vector.load %arg2[%c0_1, %c0_2] : memref<1x32xf32, #tpu.memory_space<vmem>>, vector<1x32xf32>
    %c0_3 = arith.constant 0 : index
    %c0_4 = arith.constant 0 : index
    %2 = vector.load %arg5[%c0_3, %c0_4] : memref<4x32xf32, #tpu.memory_space<vmem>>, vector<4x32xf32>
    %c0_5 = arith.constant 0 : index
    %c0_6 = arith.constant 0 : index
    %3 = vector.load %arg6[%c0_5, %c0_6] : memref<96x4xf32, #tpu.memory_space<vmem>>, vector<96x4xf32>
    %c0_7 = arith.constant 0 : index
    %c0_8 = arith.constant 0 : index
    %4 = vector.load %arg0[%c0_7, %c0_8] : memref<24x32xf32, #tpu.memory_space<vmem>>, vector<24x32xf32>
    %c0_9 = arith.constant 0 : index
    %c0_10 = arith.constant 0 : index
    %5 = vector.load %arg3[%c0_9, %c0_10] : memref<24x96xf32, #tpu.memory_space<vmem>>, vector<24x96xf32>
    %cst = arith.constant dense<0.000000e+00> : vector<24x40xf32>
    %6 = tpu.matmul %4, %0, %cst {dimension_numbers = #tpu.dot_dimension_numbers<[1], [0], [0], [1], [0, 0, 1, 1], [], []>} : vector<24x32xf32>, vector<32x40xf32>, vector<24x40xf32> -> vector<24x40xf32>
    %7 = vector.extract_strided_slice %6 {offsets = [0, 0], sizes = [24, 32], strides = [1, 1]} : vector<24x40xf32> to vector<24x32xf32>
    %8 = vector.extract_strided_slice %6 {offsets = [0, 32], sizes = [24, 4], strides = [1, 1]} : vector<24x40xf32> to vector<24x4xf32>
    %9 = vector.extract_strided_slice %6 {offsets = [0, 36], sizes = [24, 4], strides = [1, 1]} : vector<24x40xf32> to vector<24x4xf32>
    %10 = tpu.transpose %9, [1, 0] : vector<24x4xf32> -> vector<4x24xf32>
    %11 = vector.extract_strided_slice %8 {offsets = [0, 0], sizes = [24, 1], strides = [1, 1]} : vector<24x4xf32> to vector<24x1xf32>
    %12 = vector.extract_strided_slice %10 {offsets = [0, 0], sizes = [1, 24], strides = [1, 1]} : vector<4x24xf32> to vector<1x24xf32>
    %13 = vector.broadcast %11 : vector<24x1xf32> to vector<24x24xf32>
    %14 = vector.broadcast %12 : vector<1x24xf32> to vector<24x24xf32>
    %15 = arith.addf %13, %14 : vector<24x24xf32>
    %16 = vector.extract_strided_slice %8 {offsets = [0, 1], sizes = [24, 1], strides = [1, 1]} : vector<24x4xf32> to vector<24x1xf32>
    %17 = vector.extract_strided_slice %10 {offsets = [1, 0], sizes = [1, 24], strides = [1, 1]} : vector<4x24xf32> to vector<1x24xf32>
    %18 = vector.broadcast %16 : vector<24x1xf32> to vector<24x24xf32>
    %19 = vector.broadcast %17 : vector<1x24xf32> to vector<24x24xf32>
    %20 = arith.addf %18, %19 : vector<24x24xf32>
    %21 = vector.extract_strided_slice %8 {offsets = [0, 2], sizes = [24, 1], strides = [1, 1]} : vector<24x4xf32> to vector<24x1xf32>
    %22 = vector.extract_strided_slice %10 {offsets = [2, 0], sizes = [1, 24], strides = [1, 1]} : vector<4x24xf32> to vector<1x24xf32>
    %23 = vector.broadcast %21 : vector<24x1xf32> to vector<24x24xf32>
    %24 = vector.broadcast %22 : vector<1x24xf32> to vector<24x24xf32>
    %25 = arith.addf %23, %24 : vector<24x24xf32>
    %26 = vector.extract_strided_slice %8 {offsets = [0, 3], sizes = [24, 1], strides = [1, 1]} : vector<24x4xf32> to vector<24x1xf32>
    %27 = vector.extract_strided_slice %10 {offsets = [3, 0], sizes = [1, 24], strides = [1, 1]} : vector<4x24xf32> to vector<1x24xf32>
    %28 = vector.broadcast %26 : vector<24x1xf32> to vector<24x24xf32>
    %29 = vector.broadcast %27 : vector<1x24xf32> to vector<24x24xf32>
    %30 = arith.addf %28, %29 : vector<24x24xf32>
    %31 = tpu.concatenate %15, %20, %25, %30 in 1 : vector<24x24xf32>, vector<24x24xf32>, vector<24x24xf32>, vector<24x24xf32> -> vector<24x96xf32>
    %cst_11 = arith.constant 2.000000e-01 : f32
    %32 = vector.broadcast %cst_11 : f32 to vector<24x96xf32>
    %33 = arith.mulf %32, %31 : vector<24x96xf32>
    %34 = arith.maximumf %31, %33 : vector<24x96xf32>
    %35 = arith.addf %34, %5 : vector<24x96xf32>
    %cst_12 = arith.constant dense<0xFF800000> : vector<24xf32>
    %36 = vector.multi_reduction <maximumf>, %35, %cst_12 [1] : vector<24x96xf32> to vector<24xf32>
    %37 = vector.shape_cast %36 : vector<24xf32> to vector<24x1xf32>
    %38 = vector.broadcast %37 : vector<24x1xf32> to vector<24x96xf32>
    %39 = arith.subf %35, %38 : vector<24x96xf32>
    %40 = math.exp %39 : vector<24x96xf32>
    %41 = vector.shape_cast %7 : vector<24x32xf32> to vector<1x24x32xf32>
    %42 = vector.shape_cast %2 : vector<4x32xf32> to vector<4x1x32xf32>
    %43 = vector.broadcast %41 : vector<1x24x32xf32> to vector<4x24x32xf32>
    %44 = vector.broadcast %42 : vector<4x1x32xf32> to vector<4x24x32xf32>
    %45 = arith.mulf %43, %44 : vector<4x24x32xf32>
    %46 = vector.shape_cast %45 : vector<4x24x32xf32> to vector<96x32xf32>
    %47 = tpu.concatenate %46, %3 in 1 : vector<96x32xf32>, vector<96x4xf32> -> vector<96x36xf32>
    %cst_13 = arith.constant dense<0.000000e+00> : vector<24x36xf32>
    %48 = tpu.matmul %40, %47, %cst_13 {dimension_numbers = #tpu.dot_dimension_numbers<[1], [0], [0], [1], [0, 0, 1, 1], [], []>} : vector<24x96xf32>, vector<96x36xf32>, vector<24x36xf32> -> vector<24x36xf32>
    %49 = vector.extract_strided_slice %48 {offsets = [0, 0], sizes = [24, 32], strides = [1, 1]} : vector<24x36xf32> to vector<24x32xf32>
    %50 = vector.extract_strided_slice %48 {offsets = [0, 32], sizes = [24, 4], strides = [1, 1]} : vector<24x36xf32> to vector<24x4xf32>
    %51 = tpu.reciprocal %50 {approx = true} : vector<24x4xf32> -> vector<24x4xf32>
    %52 = arith.mulf %50, %51 : vector<24x4xf32>
    %cst_14 = arith.constant 2.000000e+00 : f32
    %53 = vector.broadcast %cst_14 : f32 to vector<24x4xf32>
    %54 = arith.subf %53, %52 : vector<24x4xf32>
    %55 = arith.mulf %51, %54 : vector<24x4xf32>
    %cst_15 = arith.constant dense<0.000000e+00> : vector<24x32xf32>
    %56 = tpu.matmul %55, %2, %cst_15 {dimension_numbers = #tpu.dot_dimension_numbers<[1], [0], [0], [1], [0, 0, 1, 1], [], []>} : vector<24x4xf32>, vector<4x32xf32>, vector<24x32xf32> -> vector<24x32xf32>
    %57 = arith.mulf %49, %56 : vector<24x32xf32>
    %58 = vector.broadcast %1 : vector<1x32xf32> to vector<24x32xf32>
    %59 = arith.addf %57, %58 : vector<24x32xf32>
    %c0_16 = arith.constant 0 : index
    %c0_17 = arith.constant 0 : index
    %60 = vector.load %arg4[%c0_16, %c0_17] : memref<24x96xf32, #tpu.memory_space<vmem>>, vector<24x96xf32>
    %cst_18 = arith.constant dense<0.000000e+00> : vector<24x40xf32>
    %61 = tpu.matmul %59, %0, %cst_18 {dimension_numbers = #tpu.dot_dimension_numbers<[1], [0], [0], [1], [0, 0, 1, 1], [], []>} : vector<24x32xf32>, vector<32x40xf32>, vector<24x40xf32> -> vector<24x40xf32>
    %62 = vector.extract_strided_slice %61 {offsets = [0, 0], sizes = [24, 32], strides = [1, 1]} : vector<24x40xf32> to vector<24x32xf32>
    %63 = vector.extract_strided_slice %61 {offsets = [0, 32], sizes = [24, 4], strides = [1, 1]} : vector<24x40xf32> to vector<24x4xf32>
    %64 = vector.extract_strided_slice %61 {offsets = [0, 36], sizes = [24, 4], strides = [1, 1]} : vector<24x40xf32> to vector<24x4xf32>
    %65 = tpu.transpose %64, [1, 0] : vector<24x4xf32> -> vector<4x24xf32>
    %66 = vector.extract_strided_slice %63 {offsets = [0, 0], sizes = [24, 1], strides = [1, 1]} : vector<24x4xf32> to vector<24x1xf32>
    %67 = vector.extract_strided_slice %65 {offsets = [0, 0], sizes = [1, 24], strides = [1, 1]} : vector<4x24xf32> to vector<1x24xf32>
    %68 = vector.broadcast %66 : vector<24x1xf32> to vector<24x24xf32>
    %69 = vector.broadcast %67 : vector<1x24xf32> to vector<24x24xf32>
    %70 = arith.addf %68, %69 : vector<24x24xf32>
    %71 = vector.extract_strided_slice %63 {offsets = [0, 1], sizes = [24, 1], strides = [1, 1]} : vector<24x4xf32> to vector<24x1xf32>
    %72 = vector.extract_strided_slice %65 {offsets = [1, 0], sizes = [1, 24], strides = [1, 1]} : vector<4x24xf32> to vector<1x24xf32>
    %73 = vector.broadcast %71 : vector<24x1xf32> to vector<24x24xf32>
    %74 = vector.broadcast %72 : vector<1x24xf32> to vector<24x24xf32>
    %75 = arith.addf %73, %74 : vector<24x24xf32>
    %76 = vector.extract_strided_slice %63 {offsets = [0, 2], sizes = [24, 1], strides = [1, 1]} : vector<24x4xf32> to vector<24x1xf32>
    %77 = vector.extract_strided_slice %65 {offsets = [2, 0], sizes = [1, 24], strides = [1, 1]} : vector<4x24xf32> to vector<1x24xf32>
    %78 = vector.broadcast %76 : vector<24x1xf32> to vector<24x24xf32>
    %79 = vector.broadcast %77 : vector<1x24xf32> to vector<24x24xf32>
    %80 = arith.addf %78, %79 : vector<24x24xf32>
    %81 = vector.extract_strided_slice %63 {offsets = [0, 3], sizes = [24, 1], strides = [1, 1]} : vector<24x4xf32> to vector<24x1xf32>
    %82 = vector.extract_strided_slice %65 {offsets = [3, 0], sizes = [1, 24], strides = [1, 1]} : vector<4x24xf32> to vector<1x24xf32>
    %83 = vector.broadcast %81 : vector<24x1xf32> to vector<24x24xf32>
    %84 = vector.broadcast %82 : vector<1x24xf32> to vector<24x24xf32>
    %85 = arith.addf %83, %84 : vector<24x24xf32>
    %86 = tpu.concatenate %70, %75, %80, %85 in 1 : vector<24x24xf32>, vector<24x24xf32>, vector<24x24xf32>, vector<24x24xf32> -> vector<24x96xf32>
    %cst_19 = arith.constant 2.000000e-01 : f32
    %87 = vector.broadcast %cst_19 : f32 to vector<24x96xf32>
    %88 = arith.mulf %87, %86 : vector<24x96xf32>
    %89 = arith.maximumf %86, %88 : vector<24x96xf32>
    %90 = arith.addf %89, %60 : vector<24x96xf32>
    %cst_20 = arith.constant dense<0xFF800000> : vector<24xf32>
    %91 = vector.multi_reduction <maximumf>, %90, %cst_20 [1] : vector<24x96xf32> to vector<24xf32>
    %92 = vector.shape_cast %91 : vector<24xf32> to vector<24x1xf32>
    %93 = vector.broadcast %92 : vector<24x1xf32> to vector<24x96xf32>
    %94 = arith.subf %90, %93 : vector<24x96xf32>
    %95 = math.exp %94 : vector<24x96xf32>
    %96 = vector.shape_cast %62 : vector<24x32xf32> to vector<1x24x32xf32>
    %97 = vector.shape_cast %2 : vector<4x32xf32> to vector<4x1x32xf32>
    %98 = vector.broadcast %96 : vector<1x24x32xf32> to vector<4x24x32xf32>
    %99 = vector.broadcast %97 : vector<4x1x32xf32> to vector<4x24x32xf32>
    %100 = arith.mulf %98, %99 : vector<4x24x32xf32>
    %101 = vector.shape_cast %100 : vector<4x24x32xf32> to vector<96x32xf32>
    %102 = tpu.concatenate %101, %3 in 1 : vector<96x32xf32>, vector<96x4xf32> -> vector<96x36xf32>
    %cst_21 = arith.constant dense<0.000000e+00> : vector<24x36xf32>
    %103 = tpu.matmul %95, %102, %cst_21 {dimension_numbers = #tpu.dot_dimension_numbers<[1], [0], [0], [1], [0, 0, 1, 1], [], []>} : vector<24x96xf32>, vector<96x36xf32>, vector<24x36xf32> -> vector<24x36xf32>
    %104 = vector.extract_strided_slice %103 {offsets = [0, 0], sizes = [24, 32], strides = [1, 1]} : vector<24x36xf32> to vector<24x32xf32>
    %105 = vector.extract_strided_slice %103 {offsets = [0, 32], sizes = [24, 4], strides = [1, 1]} : vector<24x36xf32> to vector<24x4xf32>
    %106 = tpu.reciprocal %105 {approx = true} : vector<24x4xf32> -> vector<24x4xf32>
    %107 = arith.mulf %105, %106 : vector<24x4xf32>
    %cst_22 = arith.constant 2.000000e+00 : f32
    %108 = vector.broadcast %cst_22 : f32 to vector<24x4xf32>
    %109 = arith.subf %108, %107 : vector<24x4xf32>
    %110 = arith.mulf %106, %109 : vector<24x4xf32>
    %cst_23 = arith.constant dense<0.000000e+00> : vector<24x32xf32>
    %111 = tpu.matmul %110, %2, %cst_23 {dimension_numbers = #tpu.dot_dimension_numbers<[1], [0], [0], [1], [0, 0, 1, 1], [], []>} : vector<24x4xf32>, vector<4x32xf32>, vector<24x32xf32> -> vector<24x32xf32>
    %112 = arith.mulf %104, %111 : vector<24x32xf32>
    %113 = vector.broadcast %1 : vector<1x32xf32> to vector<24x32xf32>
    %114 = arith.addf %112, %113 : vector<24x32xf32>
    %c0_24 = arith.constant 0 : index
    %c0_25 = arith.constant 0 : index
    %115 = vector.load %arg7[%c0_24, %c0_25] : memref<8x24xf32, #tpu.memory_space<vmem>>, vector<8x24xf32>
    %cst_26 = arith.constant dense<0.000000e+00> : vector<8x32xf32>
    %116 = tpu.matmul %115, %114, %cst_26 {dimension_numbers = #tpu.dot_dimension_numbers<[1], [0], [0], [1], [0, 0, 1, 1], [], []>} : vector<8x24xf32>, vector<24x32xf32>, vector<8x32xf32> -> vector<8x32xf32>
    %c0_27 = arith.constant 0 : index
    %c0_28 = arith.constant 0 : index
    %117 = vector.load %arg8[%c0_27, %c0_28] : memref<8x32xf32, #tpu.memory_space<vmem>>, vector<8x32xf32>
    tpu.vector_store %arg8[%c0_27, %c0_28], %116 {strides = array<i32>} : memref<8x32xf32, #tpu.memory_space<vmem>>, vector<8x32xf32>,
    return
  }
}

</mosaic_0001>

<llo_original>
// kernel: ontology_embedding_forward.1
$region0: #{ontology_embedding_forward.1}
  #allocation0 [shape = 'u32[]', space=smem, size = 0x4, offset = 0x4, fixed_abs, tag = 'smem constant byte address 0x4 - core index']
  #allocation1 [shape = 'u32[144,128]{1,0:T(1,128)}', space=vmem, size = 0x12000, scoped, tag = 'internal scratch']
  %s0 = inlined_call_operand.vmem [shape: f32[24,32], index: 0, kind: input, shape index: {}]
  %s1 = inlined_call_operand.vmem [shape: f32[32,40], index: 1, kind: input, shape index: {}]
  %s2 = inlined_call_operand.hbm [shape: f32[1,32], index: 2, kind: input, shape index: {}]
  %s3 = inlined_call_operand.vmem [shape: f32[24,96], index: 3, kind: input, shape index: {}]
  %s4 = inlined_call_operand.vmem [shape: f32[24,96], index: 4, kind: input, shape index: {}]
  %s5 = inlined_call_operand.hbm [shape: f32[4,32], index: 5, kind: input, shape index: {}]
  %s6 = inlined_call_operand.vmem [shape: f32[96,4], index: 6, kind: input, shape index: {}]
  %s7 = inlined_call_operand.vmem [shape: f32[8,24], index: 7, kind: input, shape index: {}]
  %s8 = inlined_call_operand.hbm [shape: f32[8,32], index: 8, kind: output, shape index: {}]
  %s9 = sld [smem:[#allocation0]]
  $region50: #{ontology_embedding_forward.1} parent=0
    _
  %s11 = ssub.s32 1, %s9
  %s12 = scalar_select 0, %s11, %s9
  $region1: #{ontology_embedding_forward.1} parent=0
    #allocation2 [shape = 'u8[512]{0}', space=vmem, size = 0x400, scoped, tag = 'input window, operand 2, single buffered']
    #allocation3 [shape = 's32[1]{0}', space=sflag, size = 0x4, scoped, tag = 'scoped memory for ontology_embedding_forward.1']
    #allocation4 [shape = 's32[1]{0}', space=sflag, size = 0x4, scoped, tag = 'scoped memory for ontology_embedding_forward.1']
    #allocation5 [shape = 'u8[2048]{0}', space=vmem, size = 0x800, scoped, tag = 'input window, operand 5, single buffered']
    #allocation6 [shape = 's32[1]{0}', space=sflag, size = 0x4, scoped, tag = 'scoped memory for ontology_embedding_forward.1']
    #allocation7 [shape = 'u8[4096]{0}', space=vmem, size = 0x1000, scoped, tag = 'output window, operand 0, single buffered']
    %13 = vsyncpa [#allocation3], 0
    %14 = vsyncpa [#allocation6], 0
    %15 = vsyncpa [#allocation4], 0
    // Predicated region
    $region2: #{ontology_embedding_forward.1} parent=1 // pred_check
      _
    $region3: #{ontology_embedding_forward.1} parent=1 // pred_check_branch
      %17 = sbr.rel (0) target = $region5
    $region4: #{ontology_embedding_forward.1} parent=1 // pred_region
      _
    $region5: #{ontology_embedding_forward.1} parent=1 // pred_fallthru
      _
    // Predicated region
    $region6: #{ontology_embedding_forward.1} parent=1 // pred_check
      _
    $region7: #{ontology_embedding_forward.1} parent=1 // pred_check_branch
      %19 = sbr.rel (0) target = $region9
    $region8: #{ontology_embedding_forward.1} parent=1 // pred_region
      _
    $region9: #{ontology_embedding_forward.1} parent=1 // pred_fallthru
      _
    // Predicated region
    $region10: #{ontology_embedding_forward.1} parent=1 // pred_check
      _
    $region11: #{ontology_embedding_forward.1} parent=1 // pred_check_branch
      %21 = sbr.rel (0) target = $region13
    $region12: #{ontology_embedding_forward.1} parent=1 // pred_region
      %s23 = ssub.s32 16, 16
      %24 = vsyncadd [#allocation3], %s23
      %s26 = sshll.u32 [#allocation2], 4
      %s27 = int_to_ptr.vmem [resolvable:$true] %s26
      %29 = dma.hbm_to_vmem [thread:$0]  %s2, 16, %s27, [#allocation3]
    $region13: #{ontology_embedding_forward.1} parent=1 // pred_fallthru
      _
    // Predicated region
    $region14: #{ontology_embedding_forward.1} parent=1 // pred_check
      _
    $region15: #{ontology_embedding_forward.1} parent=1 // pred_check_branch
      %31 = sbr.rel (0) target = $region17
    $region16: #{ontology_embedding_forward.1} parent=1 // pred_region
      _
    $region17: #{ontology_embedding_forward.1} parent=1 // pred_fallthru
      _
    // Predicated region
    $region18: #{ontology_embedding_forward.1} parent=1 // pred_check
      _
    $region19: #{ontology_embedding_forward.1} parent=1 // pred_check_branch
      %33 = sbr.rel (0) target = $region21
    $region20: #{ontology_embedding_forward.1} parent=1 // pred_region
      _
    $region21: #{ontology_embedding_forward.1} parent=1 // pred_fallthru
      _
    // Predicated region
    $region22: #{ontology_embedding_forward.1} parent=1 // pred_check
      _
    $region23: #{ontology_embedding_forward.1} parent=1 // pred_check_branch
      %35 = sbr.rel (0) target = $region25
    $region24: #{ontology_embedding_forward.1} parent=1 // pred_region
      %s37 = ssub.s32 64, 64
      %38 = vsyncadd [#allocation6], %s37
      %s40 = sshll.u32 [#allocation5], 4
      %s41 = int_to_ptr.vmem [resolvable:$true] %s40
      %43 = dma.hbm_to_vmem [thread:$0]  %s5, 64, %s41, [#allocation6]
    $region25: #{ontology_embedding_forward.1} parent=1 // pred_fallthru
      _
    // Predicated region
    $region26: #{ontology_embedding_forward.1} parent=1 // pred_check
      _
    $region27: #{ontology_embedding_forward.1} parent=1 // pred_check_branch
      %45 = sbr.rel (0) target = $region29
    $region28: #{ontology_embedding_forward.1} parent=1 // pred_region
      _
    $region29: #{ontology_embedding_forward.1} parent=1 // pred_fallthru
      _
    // Predicated region
    $region30: #{ontology_embedding_forward.1} parent=1 // pred_check
      _
    $region31: #{ontology_embedding_forward.1} parent=1 // pred_check_branch
      %47 = sbr.rel (0) target = $region33
    $region32: #{ontology_embedding_forward.1} parent=1 // pred_region
      _
    $region33: #{ontology_embedding_forward.1} parent=1 // pred_fallthru
      _
    // Predicated region
    $region34: #{ontology_embedding_forward.1} parent=1 // pred_check
      _
    $region35: #{ontology_embedding_forward.1} parent=1 // pred_check_branch
      %49 = sbr.rel (0) target = $region37
    $region36: #{ontology_embedding_forward.1} parent=1 // pred_region
      %50 = dma.done [#allocation3], 16
    $region37: #{ontology_embedding_forward.1} parent=1 // pred_fallthru
      _
    // Predicated region
    $region38: #{ontology_embedding_forward.1} parent=1 // pred_check
      _
    $region39: #{ontology_embedding_forward.1} parent=1 // pred_check_branch
      %52 = sbr.rel (0) target = $region41
    $region40: #{ontology_embedding_forward.1} parent=1 // pred_region
      %53 = dma.done [#allocation6], 64
    $region41: #{ontology_embedding_forward.1} parent=1 // pred_fallthru
      _
    %v54 = vld [vmem:[%s1] sm:$0xff]
    %v55 = vld [vmem:[%s1 + $0x8] sm:$0xff]
    %v56 = vld [vmem:[%s1 + $0x10] sm:$0xff]
    %v57 = vld [vmem:[%s1 + $0x18] sm:$0xff]
    %v58 = vld [vmem:[#allocation2] sm:$0x1]
    %v59 = vld [vmem:[#allocation5] sm:$0xf]
    %v60 = vld [vmem:[%s6] sm:$0xff]
    %v61 = vld [vmem:[%s6 + $0x8] sm:$0xff]
    %v62 = vld [vmem:[%s6 + $0x10] sm:$0xff]
    %v63 = vld [vmem:[%s6 + $0x18] sm:$0xff]
    %v64 = vld [vmem:[%s6 + $0x20] sm:$0xff]
    %v65 = vld [vmem:[%s6 + $0x28] sm:$0xff]
    %v66 = vld [vmem:[%s6 + $0x30] sm:$0xff]
    %v67 = vld [vmem:[%s6 + $0x38] sm:$0xff]
    %v68 = vld [vmem:[%s6 + $0x40] sm:$0xff]
    %v69 = vld [vmem:[%s6 + $0x48] sm:$0xff]
    %v70 = vld [vmem:[%s6 + $0x50] sm:$0xff]
    %v71 = vld [vmem:[%s6 + $0x58] sm:$0xff]
    %v72 = vld [vmem:[%s0] sm:$0xff]
    %v73 = vld [vmem:[%s0 + $0x8] sm:$0xff]
    %v74 = vld [vmem:[%s0 + $0x10] sm:$0xff]
    %v75 = vld [vmem:[%s3] sm:$0xff]
    %v76 = vld [vmem:[%s3 + $0x8] sm:$0xff]
    %v77 = vld [vmem:[%s3 + $0x10] sm:$0xff]
    %vm78 = vcmask 261120
    %v80 = vsel %vm78, %v72, 0
    %v83 = vsel %vm78, %v73, 0
    %v86 = vsel %vm78, %v74, 0
    %88 = vmatprep.subr.mxu0 0.0
    %89 = vmatpush1.msra.mxu0 0.0
    %90 = vmatprep.subr.mxu0 0.0
    %91 = vmatpush1.msra.mxu0 0.0
    %92 = vmatprep.subr.mxu0 0.0
    %93 = vmatpush1.msra.mxu0 0.0
    %94 = vmatprep.subr.mxu0 0.0
    %95 = vmatpush1.msra.mxu0 0.0
    %96 = vmatprep.subr.mxu0 0.0
    %97 = vmatpush1.msra.mxu0 0.0
    %98 = vmatprep.subr.mxu0 0.0
    %99 = vmatpush1.msra.mxu0 0.0
    %100 = vmatprep.subr.mxu0 0.0
    %101 = vmatpush1.msra.mxu0 0.0
    %102 = vmatprep.subr.mxu0 0.0
    %103 = vmatpush1.msra.mxu0 0.0
    %104 = vmatprep.subr.mxu0 0.0
    %105 = vmatpush1.msra.mxu0 0.0
    %106 = vmatprep.subr.mxu0 0.0
    %107 = vmatpush1.msra.mxu0 0.0
    %108 = vmatprep.subr.mxu0 0.0
    %109 = vmatpush1.msra.mxu0 0.0
    %110 = vmatprep.subr.mxu0 0.0
    %111 = vmatpush1.msra.mxu0 0.0
    %112 = vmatprep.subr.mxu0 0.0
    %113 = vmatpush1.msra.mxu0 %v57
    %114 = vmatprep.subr.mxu0 0.0
    %115 = vmatpush1.msra.mxu0 %v56
    %116 = vmatprep.subr.mxu0 0.0
    %117 = vmatpush1.msra.mxu0 %v55
    %118 = vmatprep.subr.mxu0 0.0
    %119 = vmatpush1.msra.mxu0 %v54
    %120 = vmatprep.subr.mxu0 0.0
    %121 = vmatpush2.msra.mxu0 0.0
    %122 = vmatprep.subr.mxu0 0.0
    %123 = vmatpush2.msra.mxu0 0.0
    %124 = vmatprep.subr.mxu0 0.0
    %125 = vmatpush2.msra.mxu0 0.0
    %126 = vmatprep.subr.mxu0 0.0
    %127 = vmatpush2.msra.mxu0 0.0
    %128 = vmatprep.subr.mxu0 0.0
    %129 = vmatpush2.msra.mxu0 0.0
    %130 = vmatprep.subr.mxu0 0.0
    %131 = vmatpush2.msra.mxu0 0.0
    %132 = vmatprep.subr.mxu0 0.0
    %133 = vmatpush2.msra.mxu0 0.0
    %134 = vmatprep.subr.mxu0 0.0
    %135 = vmatpush2.msra.mxu0 0.0
    %136 = vmatprep.subr.mxu0 0.0
    %137 = vmatpush2.msra.mxu0 0.0
    %138 = vmatprep.subr.mxu0 0.0
    %139 = vmatpush2.msra.mxu0 0.0
    %140 = vmatprep.subr.mxu0 0.0
    %141 = vmatpush2.msra.mxu0 0.0
    %142 = vmatprep.subr.mxu0 0.0
    %143 = vmatpush2.msra.mxu0 0.0
    %144 = vmatprep.subr.mxu0 0.0
    %145 = vmatpush2.msra.mxu0 0.0
    %146 = vmatprep.subr.mxu0 0.0
    %147 = vmatpush2.msra.mxu0 0.0
    %148 = vmatprep.subr.mxu0 0.0
    %149 = vmatpush2.msra.mxu0 0.0
    %150 = vmatprep.subr.mxu0 0.0
    %151 = vmatpush2.msra.mxu0 0.0
    %152 = vmatprep.mubr.f32.mxu0 0.0
    %153 = vmatmul.mubr.f32.gmra.mxu0 %v80
    %v154 = vpop.f32.mrf.mxu0
    %v155 = vadd.f32 0.0, %v154
    %v156 = vpop.f32.mrf.mxu0
    %157 = vmatprep.mubr.f32.mxu0 0.0
    %158 = vmatmul.mubr.f32.gmra.mxu0 %v83
    %v159 = vpop.f32.mrf.mxu0
    %v160 = vadd.f32 0.0, %v159
    %v161 = vpop.f32.mrf.mxu0
    %162 = vmatprep.mubr.f32.mxu0 0.0
    %163 = vmatmul.mubr.f32.gmra.mxu0 %v86
    %v164 = vpop.f32.mrf.mxu0
    %v165 = vadd.f32 0.0, %v164
    %v166 = vpop.f32.mrf.mxu0
    %167 = vdwg.mxu0
    %171 = vrot.lane.b32.xlu0 %v155, 92
    %v172 = vpop.permute.xlu0 %171
    %173 = vrot.lane.b32.xlu0 %v160, 92
    %v174 = vpop.permute.xlu0 %173
    %175 = vrot.lane.b32.xlu0 %v165, 92
    %v176 = vpop.permute.xlu0 %175
    %180 = vxpose.xlu0.b32.start [1/16] %v172, 128
    %181 = vxpose.xlu0.b32.cont [2/16] %v174, 128
    %182 = vxpose.xlu0.b32.cont [3/16] %v176, 128
    %183 = vxpose.xlu0.b32.cont [4/16] 0.0, 128
    %184 = vxpose.xlu0.b32.cont [5/16] 0.0, 128
    %185 = vxpose.xlu0.b32.cont [6/16] 0.0, 128
    %186 = vxpose.xlu0.b32.cont [7/16] 0.0, 128
    %187 = vxpose.xlu0.b32.cont [8/16] 0.0, 128
    %188 = vxpose.xlu0.b32.cont [9/16] 0.0, 128
    %189 = vxpose.xlu0.b32.cont [10/16] 0.0, 128
    %190 = vxpose.xlu0.b32.cont [11/16] 0.0, 128
    %191 = vxpose.xlu0.b32.cont [12/16] 0.0, 128
    %192 = vxpose.xlu0.b32.cont [13/16] 0.0, 128
    %193 = vxpose.xlu0.b32.cont [14/16] 0.0, 128
    %194 = vxpose.xlu0.b32.cont [15/16] 0.0, 128
    %195 = vxpose.xlu0.b32.end [16/16] 0.0, 128
    %v196 = vpop.trf.xlu0
    %v197 = vpop.trf.xlu0
    %v198 = vpop.trf.xlu0
    %v199 = vpop.trf.xlu0
    %v200 = vpop.trf.xlu0
    %v201 = vpop.trf.xlu0
    %v202 = vpop.trf.xlu0
    %v203 = vpop.trf.xlu0
    %v204 = vpop.trf.xlu0
    %v205 = vpop.trf.xlu0
    %v206 = vpop.trf.xlu0
    %v207 = vpop.trf.xlu0
    %v208 = vpop.trf.xlu0
    %v209 = vpop.trf.xlu0
    %v210 = vpop.trf.xlu0
    %v211 = vpop.trf.xlu0
    %212 = vset.pattern.permute.xlu0 32
    %213 = vperm.xlu0 %212, %v155
    %v214 = vpop.permute.xlu0 %213
    %216 = vset.pattern.permute.xlu0 32
    %217 = vperm.xlu0 %216, %v160
    %v218 = vpop.permute.xlu0 %217
    %220 = vset.pattern.permute.xlu0 32
    %221 = vperm.xlu0 %220, %v165
    %v222 = vpop.permute.xlu0 %221
    %v224 = vlaneseq
    %v225 = vshrl.u32 %v224, 7
    %v226 = vsub.s32 0, %v225
    %v227 = vrot.slane %v196, %v226
    %v228 = vadd.f32 %v214, %v227
    %v229 = vadd.f32 %v218, %v227
    %v230 = vadd.f32 %v222, %v227
    %231 = vset.pattern.permute.xlu0 33
    %232 = vperm.xlu0 %231, %v155
    %v233 = vpop.permute.xlu0 %232
    %235 = vset.pattern.permute.xlu0 33
    %236 = vperm.xlu0 %235, %v160
    %v237 = vpop.permute.xlu0 %236
    %239 = vset.pattern.permute.xlu0 33
    %240 = vperm.xlu0 %239, %v165
    %v241 = vpop.permute.xlu0 %240
    %v243 = vlaneseq
    %v244 = vshrl.u32 %v243, 7
    %v245 = vsub.s32 1, %v244
    %v246 = vrot.slane %v196, %v245
    %v247 = vadd.f32 %v233, %v246
    %v248 = vadd.f32 %v237, %v246
    %v249 = vadd.f32 %v241, %v246
    %250 = vset.pattern.permute.xlu0 34
    %251 = vperm.xlu0 %250, %v155
    %v252 = vpop.permute.xlu0 %251
    %254 = vset.pattern.permute.xlu0 34
    %255 = vperm.xlu0 %254, %v160
    %v256 = vpop.permute.xlu0 %255
    %258 = vset.pattern.permute.xlu0 34
    %259 = vperm.xlu0 %258, %v165
    %v260 = vpop.permute.xlu0 %259
    %v262 = vlaneseq
    %v263 = vshrl.u32 %v262, 7
    %v264 = vsub.s32 2, %v263
    %v265 = vrot.slane %v196, %v264
    %v266 = vadd.f32 %v252, %v265
    %v267 = vadd.f32 %v256, %v265
    %v268 = vadd.f32 %v260, %v265
    %269 = vset.pattern.permute.xlu0 35
    %270 = vperm.xlu0 %269, %v155
    %v271 = vpop.permute.xlu0 %270
    %273 = vset.pattern.permute.xlu0 35
    %274 = vperm.xlu0 %273, %v160
    %v275 = vpop.permute.xlu0 %274
    %277 = vset.pattern.permute.xlu0 35
    %278 = vperm.xlu0 %277, %v165
    %v279 = vpop.permute.xlu0 %278
    %v281 = vlaneseq
    %v282 = vshrl.u32 %v281, 7
    %v283 = vsub.s32 3, %v282
    %v284 = vrot.slane %v196, %v283
    %v285 = vadd.f32 %v271, %v284
    %v286 = vadd.f32 %v275, %v284
    %v287 = vadd.f32 %v279, %v284
    %291 = vrot.lane.b32.xlu0 %v247, 24
    %v292 = vpop.permute.xlu0 %291
    %293 = vrot.lane.b32.xlu0 %v248, 24
    %v294 = vpop.permute.xlu0 %293
    %295 = vrot.lane.b32.xlu0 %v249, 24
    %v296 = vpop.permute.xlu0 %295
    %303 = vrot.lane.b32.xlu0 %v266, 48
    %v304 = vpop.permute.xlu0 %303
    %305 = vrot.lane.b32.xlu0 %v267, 48
    %v306 = vpop.permute.xlu0 %305
    %307 = vrot.lane.b32.xlu0 %v268, 48
    %v308 = vpop.permute.xlu0 %307
    %315 = vrot.lane.b32.xlu0 %v285, 72
    %v316 = vpop.permute.xlu0 %315
    %317 = vrot.lane.b32.xlu0 %v286, 72
    %v318 = vpop.permute.xlu0 %317
    %319 = vrot.lane.b32.xlu0 %v287, 72
    %v320 = vpop.permute.xlu0 %319
    %vm324 = vcmask 195584
    %v325 = vsel %vm324, %v228, %v292
    %v326 = vsel %vm324, %v229, %v294
    %v327 = vsel %vm324, %v230, %v296
    %vm328 = vcmask 392192
    %v329 = vsel %vm328, %v325, %v304
    %v330 = vsel %vm328, %v326, %v306
    %v331 = vsel %vm328, %v327, %v308
    %vm332 = vcmask 588800
    %v333 = vsel %vm332, %v329, %v316
    %v334 = vsel %vm332, %v330, %v318
    %v335 = vsel %vm332, %v331, %v320
    %v336 = vmul.f32 %v333, 0.2
    %v337 = vmul.f32 %v334, 0.2
    %v338 = vmul.f32 %v335, 0.2
    %v339 = vmax.f32 %v333, %v336
    %v340 = vmax.f32 %v334, %v337
    %v341 = vmax.f32 %v335, %v338
    %v342 = vadd.f32 %v339, %v75
    %v343 = vadd.f32 %v340, %v76
    %v344 = vadd.f32 %v341, %v77
    %vm345 = vcmask 785408
    %v346 = vsel %vm345, %v342, -inf
    %347 = vmax.xlane.f32.xlu0 %v346
    %v348 = vpop.xlane.xlu0 %347
    %v349 = vsel %vm345, %v343, -inf
    %350 = vmax.xlane.f32.xlu0 %v349
    %v351 = vpop.xlane.xlu0 %350
    %v352 = vsel %vm345, %v344, -inf
    %353 = vmax.xlane.f32.xlu0 %v352
    %v354 = vpop.xlane.xlu0 %353
    %v355 = vsub.f32 %v342, %v348
    %v356 = vsub.f32 %v343, %v351
    %v357 = vsub.f32 %v344, %v354
    %v358 = vmul.f32 %v355, 1.442695
    %v359 = vpow.pop %v358
    %v360 = vmul.f32 %v356, 1.442695
    %v361 = vpow.pop %v360
    %v362 = vmul.f32 %v357, 1.442695
    %v363 = vpow.pop %v362
    %v366 = vunpack.c.l.s4 1966171168
    %v367 = vunpack.c.0.s8 %v366
    %v368 = vlaneseq
    %v369 = vshrl.u32 %v368, 7
    %v370 = vsub.s32 %v367, %v369
    %v371 = vrot.slane %v59, %v370
    %v372 = vcombine.high %v371, %v371
    %v374 = vunpack.c.l.s4 1966171168
    %v375 = vunpack.c.0.s8 %v374
    %v376 = vlaneseq
    %v377 = vshrl.u32 %v376, 7
    %v378 = vsub.s32 %v375, %v377
    %v379 = vrot.slane %v371, %v378
    %v381 = vunpack.c.l.s4 1966171168
    %v382 = vunpack.c.0.s8 %v381
    %v383 = vlaneseq
    %v384 = vshrl.u32 %v383, 7
    %v385 = vsub.s32 %v382, %v384
    %v386 = vrot.slane %v372, %v385
    %v387 = vcombine.high %v379, %v379
    %v388 = vcombine.high %v386, %v386
    %v389 = vlaneseq
    %v390 = vshrl.u32 %v389, 7
    %v391 = vsub.s32 0, %v390
    %v392 = vrot.slane %v379, %v391
    %v393 = vlaneseq
    %v394 = vshrl.u32 %v393, 7
    %v395 = vsub.s32 0, %v394
    %v396 = vrot.slane %v386, %v395
    %v397 = vlaneseq
    %v398 = vshrl.u32 %v397, 7
    %v399 = vsub.s32 0, %v398
    %v400 = vrot.slane %v387, %v399
    %v401 = vlaneseq
    %v402 = vshrl.u32 %v401, 7
    %v403 = vsub.s32 0, %v402
    %v404 = vrot.slane %v388, %v403
    %v409 = vmul.f32 %v155, %v392
    %v410 = vmul.f32 %v160, %v392
    %v411 = vmul.f32 %v165, %v392
    %v412 = vmul.f32 %v155, %v396
    %v413 = vmul.f32 %v160, %v396
    %v414 = vmul.f32 %v165, %v396
    %v415 = vmul.f32 %v155, %v400
    %v416 = vmul.f32 %v160, %v400
    %v417 = vmul.f32 %v165, %v400
    %v418 = vmul.f32 %v155, %v404
    %v419 = vmul.f32 %v160, %v404
    %v420 = vmul.f32 %v165, %v404
    %433 = vrot.lane.b32.xlu0 %v60, 32
    %v434 = vpop.permute.xlu0 %433
    %435 = vrot.lane.b32.xlu0 %v61, 32
    %v436 = vpop.permute.xlu0 %435
    %437 = vrot.lane.b32.xlu0 %v62, 32
    %v438 = vpop.permute.xlu0 %437
    %439 = vrot.lane.b32.xlu0 %v63, 32
    %v440 = vpop.permute.xlu0 %439
    %441 = vrot.lane.b32.xlu0 %v64, 32
    %v442 = vpop.permute.xlu0 %441
    %443 = vrot.lane.b32.xlu0 %v65, 32
    %v444 = vpop.permute.xlu0 %443
    %445 = vrot.lane.b32.xlu0 %v66, 32
    %v446 = vpop.permute.xlu0 %445
    %447 = vrot.lane.b32.xlu0 %v67, 32
    %v448 = vpop.permute.xlu0 %447
    %449 = vrot.lane.b32.xlu0 %v68, 32
    %v450 = vpop.permute.xlu0 %449
    %451 = vrot.lane.b32.xlu0 %v69, 32
    %v452 = vpop.permute.xlu0 %451
    %453 = vrot.lane.b32.xlu0 %v70, 32
    %v454 = vpop.permute.xlu0 %453
    %455 = vrot.lane.b32.xlu0 %v71, 32
    %v456 = vpop.permute.xlu0 %455
    %v469 = vsel %vm78, %v409, %v434
    %v470 = vsel %vm78, %v410, %v436
    %v471 = vsel %vm78, %v411, %v438
    %v472 = vsel %vm78, %v412, %v440
    %v473 = vsel %vm78, %v413, %v442
    %v474 = vsel %vm78, %v414, %v444
    %v475 = vsel %vm78, %v415, %v446
    %v476 = vsel %vm78, %v416, %v448
    %v477 = vsel %vm78, %v417, %v450
    %v478 = vsel %vm78, %v418, %v452
    %v479 = vsel %vm78, %v419, %v454
    %v480 = vsel %vm78, %v420, %v456
    %v482 = vsel %vm345, %v359, 0
    %v485 = vsel %vm345, %v361, 0
    %v488 = vsel %vm345, %v363, 0
    %490 = vmatprep.subr.mxu0 0.0
    %491 = vmatpush1.msra.mxu0 0.0
    %492 = vmatprep.subr.mxu0 0.0
    %493 = vmatpush1.msra.mxu0 0.0
    %494 = vmatprep.subr.mxu0 0.0
    %495 = vmatpush1.msra.mxu0 0.0
    %496 = vmatprep.subr.mxu0 0.0
    %497 = vmatpush1.msra.mxu0 0.0
    %498 = vmatprep.subr.mxu0 0.0
    %499 = vmatpush1.msra.mxu0 %v480
    %500 = vmatprep.subr.mxu0 0.0
    %501 = vmatpush1.msra.mxu0 %v479
    %502 = vmatprep.subr.mxu0 0.0
    %503 = vmatpush1.msra.mxu0 %v478
    %504 = vmatprep.subr.mxu0 0.0
    %505 = vmatpush1.msra.mxu0 %v477
    %506 = vmatprep.subr.mxu0 0.0
    %507 = vmatpush1.msra.mxu0 %v476
    %508 = vmatprep.subr.mxu0 0.0
    %509 = vmatpush1.msra.mxu0 %v475
    %510 = vmatprep.subr.mxu0 0.0
    %511 = vmatpush1.msra.mxu0 %v474
    %512 = vmatprep.subr.mxu0 0.0
    %513 = vmatpush1.msra.mxu0 %v473
    %514 = vmatprep.subr.mxu0 0.0
    %515 = vmatpush1.msra.mxu0 %v472
    %516 = vmatprep.subr.mxu0 0.0
    %517 = vmatpush1.msra.mxu0 %v471
    %518 = vmatprep.subr.mxu0 0.0
    %519 = vmatpush1.msra.mxu0 %v470
    %520 = vmatprep.subr.mxu0 0.0
    %521 = vmatpush1.msra.mxu0 %v469
    %522 = vmatprep.subr.mxu0 0.0
    %523 = vmatpush2.msra.mxu0 0.0
    %524 = vmatprep.subr.mxu0 0.0
    %525 = vmatpush2.msra.mxu0 0.0
    %526 = vmatprep.subr.mxu0 0.0
    %527 = vmatpush2.msra.mxu0 0.0
    %528 = vmatprep.subr.mxu0 0.0
    %529 = vmatpush2.msra.mxu0 0.0
    %530 = vmatprep.subr.mxu0 0.0
    %531 = vmatpush2.msra.mxu0 0.0
    %532 = vmatprep.subr.mxu0 0.0
    %533 = vmatpush2.msra.mxu0 0.0
    %534 = vmatprep.subr.mxu0 0.0
    %535 = vmatpush2.msra.mxu0 0.0
    %536 = vmatprep.subr.mxu0 0.0
    %537 = vmatpush2.msra.mxu0 0.0
    %538 = vmatprep.subr.mxu0 0.0
    %539 = vmatpush2.msra.mxu0 0.0
    %540 = vmatprep.subr.mxu0 0.0
    %541 = vmatpush2.msra.mxu0 0.0
    %542 = vmatprep.subr.mxu0 0.0
    %543 = vmatpush2.msra.mxu0 0.0
    %544 = vmatprep.subr.mxu0 0.0
    %545 = vmatpush2.msra.mxu0 0.0
    %546 = vmatprep.subr.mxu0 0.0
    %547 = vmatpush2.msra.mxu0 0.0
    %548 = vmatprep.subr.mxu0 0.0
    %549 = vmatpush2.msra.mxu0 0.0
    %550 = vmatprep.subr.mxu0 0.0
    %551 = vmatpush2.msra.mxu0 0.0
    %552 = vmatprep.subr.mxu0 0.0
    %553 = vmatpush2.msra.mxu0 0.0
    %554 = vmatprep.mubr.f32.mxu0 0.0
    %555 = vmatmul.mubr.f32.gmra.mxu0 %v482
    %v556 = vpop.f32.mrf.mxu0
    %v557 = vadd.f32 0.0, %v556
    %v558 = vpop.f32.mrf.mxu0
    %559 = vmatprep.mubr.f32.mxu0 0.0
    %560 = vmatmul.mubr.f32.gmra.mxu0 %v485
    %v561 = vpop.f32.mrf.mxu0
    %v562 = vadd.f32 0.0, %v561
    %v563 = vpop.f32.mrf.mxu0
    %564 = vmatprep.mubr.f32.mxu0 0.0
    %565 = vmatmul.mubr.f32.gmra.mxu0 %v488
    %v566 = vpop.f32.mrf.mxu0
    %v567 = vadd.f32 0.0, %v566
    %v568 = vpop.f32.mrf.mxu0
    %569 = vdwg.mxu0
    %v570 = vrcp.pop %v557
    %v571 = vrcp.pop %v562
    %v572 = vrcp.pop %v567
    %v573 = vmul.f32 %v557, %v570
    %v574 = vmul.f32 %v562, %v571
    %v575 = vmul.f32 %v567, %v572
    %v576 = vsub.f32 2.0, %v573
    %v577 = vsub.f32 2.0, %v574
    %v578 = vsub.f32 2.0, %v575
    %v579 = vmul.f32 %v570, %v576
    %v580 = vmul.f32 %v571, %v577
    %v581 = vmul.f32 %v572, %v578
    %585 = vrot.lane.b32.xlu0 %v579, 96
    %v586 = vpop.permute.xlu0 %585
    %587 = vrot.lane.b32.xlu0 %v580, 96
    %v588 = vpop.permute.xlu0 %587
    %589 = vrot.lane.b32.xlu0 %v581, 96
    %v590 = vpop.permute.xlu0 %589
    %vm591 = vcmask 31744
    %v592 = vsel %vm591, %v586, 0
    %v594 = vsel %vm591, %v588, 0
    %v596 = vsel %vm591, %v590, 0
    %vm598 = vcmask 1043456
    %v599 = vsel %vm598, %v59, 0
    %601 = vmatprep.subr.mxu0 0.0
    %602 = vmatpush1.msra.mxu0 0.0
    %603 = vmatprep.subr.mxu0 0.0
    %604 = vmatpush1.msra.mxu0 0.0
    %605 = vmatprep.subr.mxu0 0.0
    %606 = vmatpush1.msra.mxu0 0.0
    %607 = vmatprep.subr.mxu0 0.0
    %608 = vmatpush1.msra.mxu0 0.0
    %609 = vmatprep.subr.mxu0 0.0
    %610 = vmatpush1.msra.mxu0 0.0
    %611 = vmatprep.subr.mxu0 0.0
    %612 = vmatpush1.msra.mxu0 0.0
    %613 = vmatprep.subr.mxu0 0.0
    %614 = vmatpush1.msra.mxu0 0.0
    %615 = vmatprep.subr.mxu0 0.0
    %616 = vmatpush1.msra.mxu0 0.0
    %617 = vmatprep.subr.mxu0 0.0
    %618 = vmatpush1.msra.mxu0 0.0
    %619 = vmatprep.subr.mxu0 0.0
    %620 = vmatpush1.msra.mxu0 0.0
    %621 = vmatprep.subr.mxu0 0.0
    %622 = vmatpush1.msra.mxu0 0.0
    %623 = vmatprep.subr.mxu0 0.0
    %624 = vmatpush1.msra.mxu0 0.0
    %625 = vmatprep.subr.mxu0 0.0
    %626 = vmatpush1.msra.mxu0 0.0
    %627 = vmatprep.subr.mxu0 0.0
    %628 = vmatpush1.msra.mxu0 0.0
    %629 = vmatprep.subr.mxu0 0.0
    %630 = vmatpush1.msra.mxu0 0.0
    %631 = vmatprep.subr.mxu0 0.0
    %632 = vmatpush1.msra.mxu0 %v599
    %633 = vmatprep.subr.mxu0 0.0
    %634 = vmatpush2.msra.mxu0 0.0
    %635 = vmatprep.subr.mxu0 0.0
    %636 = vmatpush2.msra.mxu0 0.0
    %637 = vmatprep.subr.mxu0 0.0
    %638 = vmatpush2.msra.mxu0 0.0
    %639 = vmatprep.subr.mxu0 0.0
    %640 = vmatpush2.msra.mxu0 0.0
    %641 = vmatprep.subr.mxu0 0.0
    %642 = vmatpush2.msra.mxu0 0.0
    %643 = vmatprep.subr.mxu0 0.0
    %644 = vmatpush2.msra.mxu0 0.0
    %645 = vmatprep.subr.mxu0 0.0
    %646 = vmatpush2.msra.mxu0 0.0
    %647 = vmatprep.subr.mxu0 0.0
    %648 = vmatpush2.msra.mxu0 0.0
    %649 = vmatprep.subr.mxu0 0.0
    %650 = vmatpush2.msra.mxu0 0.0
    %651 = vmatprep.subr.mxu0 0.0
    %652 = vmatpush2.msra.mxu0 0.0
    %653 = vmatprep.subr.mxu0 0.0
    %654 = vmatpush2.msra.mxu0 0.0
    %655 = vmatprep.subr.mxu0 0.0
    %656 = vmatpush2.msra.mxu0 0.0
    %657 = vmatprep.subr.mxu0 0.0
    %658 = vmatpush2.msra.mxu0 0.0
    %659 = vmatprep.subr.mxu0 0.0
    %660 = vmatpush2.msra.mxu0 0.0
    %661 = vmatprep.subr.mxu0 0.0
    %662 = vmatpush2.msra.mxu0 0.0
    %663 = vmatprep.subr.mxu0 0.0
    %664 = vmatpush2.msra.mxu0 0.0
    %665 = vmatprep.mubr.f32.mxu0 0.0
    %666 = vmatmul.mubr.f32.gmra.mxu0 %v592
    %v667 = vpop.f32.mrf.mxu0
    %v668 = vadd.f32 0.0, %v667
    %v669 = vpop.f32.mrf.mxu0
    %670 = vmatprep.mubr.f32.mxu0 0.0
    %671 = vmatmul.mubr.f32.gmra.mxu0 %v594
    %v672 = vpop.f32.mrf.mxu0
    %v673 = vadd.f32 0.0, %v672
    %v674 = vpop.f32.mrf.mxu0
    %675 = vmatprep.mubr.f32.mxu0 0.0
    %676 = vmatmul.mubr.f32.gmra.mxu0 %v596
    %v677 = vpop.f32.mrf.mxu0
    %v678 = vadd.f32 0.0, %v677
    %v679 = vpop.f32.mrf.mxu0
    %680 = vdwg.mxu0
    %v681 = vmul.f32 %v557, %v668
    %v682 = vmul.f32 %v562, %v673
    %v683 = vmul.f32 %v567, %v678
    %v685 = vlaneseq
    %v686 = vshrl.u32 %v685, 7
    %v687 = vsub.s32 0, %v686
    %v688 = vrot.slane %v58, %v687
    %v690 = vadd.f32 %v681, %v688
    %v691 = vadd.f32 %v682, %v688
    %v692 = vadd.f32 %v683, %v688
    %v693 = vld [vmem:[%s4] sm:$0xff]
    %v694 = vld [vmem:[%s4 + $0x8] sm:$0xff]
    %v695 = vld [vmem:[%s4 + $0x10] sm:$0xff]
    %v697 = vsel %vm78, %v690, 0
    %v700 = vsel %vm78, %v691, 0
    %v703 = vsel %vm78, %v692, 0
    %705 = vmatprep.subr.mxu0 0.0
    %706 = vmatpush1.msra.mxu0 0.0
    %707 = vmatprep.subr.mxu0 0.0
    %708 = vmatpush1.msra.mxu0 0.0
    %709 = vmatprep.subr.mxu0 0.0
    %710 = vmatpush1.msra.mxu0 0.0
    %711 = vmatprep.subr.mxu0 0.0
    %712 = vmatpush1.msra.mxu0 0.0
    %713 = vmatprep.subr.mxu0 0.0
    %714 = vmatpush1.msra.mxu0 0.0
    %715 = vmatprep.subr.mxu0 0.0
    %716 = vmatpush1.msra.mxu0 0.0
    %717 = vmatprep.subr.mxu0 0.0
    %718 = vmatpush1.msra.mxu0 0.0
    %719 = vmatprep.subr.mxu0 0.0
    %720 = vmatpush1.msra.mxu0 0.0
    %721 = vmatprep.subr.mxu0 0.0
    %722 = vmatpush1.msra.mxu0 0.0
    %723 = vmatprep.subr.mxu0 0.0
    %724 = vmatpush1.msra.mxu0 0.0
    %725 = vmatprep.subr.mxu0 0.0
    %726 = vmatpush1.msra.mxu0 0.0
    %727 = vmatprep.subr.mxu0 0.0
    %728 = vmatpush1.msra.mxu0 0.0
    %729 = vmatprep.subr.mxu0 0.0
    %730 = vmatpush1.msra.mxu0 %v57
    %731 = vmatprep.subr.mxu0 0.0
    %732 = vmatpush1.msra.mxu0 %v56
    %733 = vmatprep.subr.mxu0 0.0
    %734 = vmatpush1.msra.mxu0 %v55
    %735 = vmatprep.subr.mxu0 0.0
    %736 = vmatpush1.msra.mxu0 %v54
    %737 = vmatprep.subr.mxu0 0.0
    %738 = vmatpush2.msra.mxu0 0.0
    %739 = vmatprep.subr.mxu0 0.0
    %740 = vmatpush2.msra.mxu0 0.0
    %741 = vmatprep.subr.mxu0 0.0
    %742 = vmatpush2.msra.mxu0 0.0
    %743 = vmatprep.subr.mxu0 0.0
    %744 = vmatpush2.msra.mxu0 0.0
    %745 = vmatprep.subr.mxu0 0.0
    %746 = vmatpush2.msra.mxu0 0.0
    %747 = vmatprep.subr.mxu0 0.0
    %748 = vmatpush2.msra.mxu0 0.0
    %749 = vmatprep.subr.mxu0 0.0
    %750 = vmatpush2.msra.mxu0 0.0
    %751 = vmatprep.subr.mxu0 0.0
    %752 = vmatpush2.msra.mxu0 0.0
    %753 = vmatprep.subr.mxu0 0.0
    %754 = vmatpush2.msra.mxu0 0.0
    %755 = vmatprep.subr.mxu0 0.0
    %756 = vmatpush2.msra.mxu0 0.0
    %757 = vmatprep.subr.mxu0 0.0
    %758 = vmatpush2.msra.mxu0 0.0
    %759 = vmatprep.subr.mxu0 0.0
    %760 = vmatpush2.msra.mxu0 0.0
    %761 = vmatprep.subr.mxu0 0.0
    %762 = vmatpush2.msra.mxu0 0.0
    %763 = vmatprep.subr.mxu0 0.0
    %764 = vmatpush2.msra.mxu0 0.0
    %765 = vmatprep.subr.mxu0 0.0
    %766 = vmatpush2.msra.mxu0 0.0
    %767 = vmatprep.subr.mxu0 0.0
    %768 = vmatpush2.msra.mxu0 0.0
    %769 = vmatprep.mubr.f32.mxu0 0.0
    %770 = vmatmul.mubr.f32.gmra.mxu0 %v697
    %v771 = vpop.f32.mrf.mxu0
    %v772 = vadd.f32 0.0, %v771
    %v773 = vpop.f32.mrf.mxu0
    %774 = vmatprep.mubr.f32.mxu0 0.0
    %775 = vmatmul.mubr.f32.gmra.mxu0 %v700
    %v776 = vpop.f32.mrf.mxu0
    %v777 = vadd.f32 0.0, %v776
    %v778 = vpop.f32.mrf.mxu0
    %779 = vmatprep.mubr.f32.mxu0 0.0
    %780 = vmatmul.mubr.f32.gmra.mxu0 %v703
    %v781 = vpop.f32.mrf.mxu0
    %v782 = vadd.f32 0.0, %v781
    %v783 = vpop.f32.mrf.mxu0
    %784 = vdwg.mxu0
    %788 = vrot.lane.b32.xlu0 %v772, 92
    %v789 = vpop.permute.xlu0 %788
    %790 = vrot.lane.b32.xlu0 %v777, 92
    %v791 = vpop.permute.xlu0 %790
    %792 = vrot.lane.b32.xlu0 %v782, 92
    %v793 = vpop.permute.xlu0 %792
    %797 = vxpose.xlu0.b32.start [1/16] %v789, 128
    %798 = vxpose.xlu0.b32.cont [2/16] %v791, 128
    %799 = vxpose.xlu0.b32.cont [3/16] %v793, 128
    %800 = vxpose.xlu0.b32.cont [4/16] 0.0, 128
    %801 = vxpose.xlu0.b32.cont [5/16] 0.0, 128
    %802 = vxpose.xlu0.b32.cont [6/16] 0.0, 128
    %803 = vxpose.xlu0.b32.cont [7/16] 0.0, 128
    %804 = vxpose.xlu0.b32.cont [8/16] 0.0, 128
    %805 = vxpose.xlu0.b32.cont [9/16] 0.0, 128
    %806 = vxpose.xlu0.b32.cont [10/16] 0.0, 128
    %807 = vxpose.xlu0.b32.cont [11/16] 0.0, 128
    %808 = vxpose.xlu0.b32.cont [12/16] 0.0, 128
    %809 = vxpose.xlu0.b32.cont [13/16] 0.0, 128
    %810 = vxpose.xlu0.b32.cont [14/16] 0.0, 128
    %811 = vxpose.xlu0.b32.cont [15/16] 0.0, 128
    %812 = vxpose.xlu0.b32.end [16/16] 0.0, 128
    %v813 = vpop.trf.xlu0
    %v814 = vpop.trf.xlu0
    %v815 = vpop.trf.xlu0
    %v816 = vpop.trf.xlu0
    %v817 = vpop.trf.xlu0
    %v818 = vpop.trf.xlu0
    %v819 = vpop.trf.xlu0
    %v820 = vpop.trf.xlu0
    %v821 = vpop.trf.xlu0
    %v822 = vpop.trf.xlu0
    %v823 = vpop.trf.xlu0
    %v824 = vpop.trf.xlu0
    %v825 = vpop.trf.xlu0
    %v826 = vpop.trf.xlu0
    %v827 = vpop.trf.xlu0
    %v828 = vpop.trf.xlu0
    %829 = vset.pattern.permute.xlu0 32
    %830 = vperm.xlu0 %829, %v772
    %v831 = vpop.permute.xlu0 %830
    %833 = vset.pattern.permute.xlu0 32
    %834 = vperm.xlu0 %833, %v777
    %v835 = vpop.permute.xlu0 %834
    %837 = vset.pattern.permute.xlu0 32
    %838 = vperm.xlu0 %837, %v782
    %v839 = vpop.permute.xlu0 %838
    %v841 = vlaneseq
    %v842 = vshrl.u32 %v841, 7
    %v843 = vsub.s32 0, %v842
    %v844 = vrot.slane %v813, %v843
    %v845 = vadd.f32 %v831, %v844
    %v846 = vadd.f32 %v835, %v844
    %v847 = vadd.f32 %v839, %v844
    %848 = vset.pattern.permute.xlu0 33
    %849 = vperm.xlu0 %848, %v772
    %v850 = vpop.permute.xlu0 %849
    %852 = vset.pattern.permute.xlu0 33
    %853 = vperm.xlu0 %852, %v777
    %v854 = vpop.permute.xlu0 %853
    %856 = vset.pattern.permute.xlu0 33
    %857 = vperm.xlu0 %856, %v782
    %v858 = vpop.permute.xlu0 %857
    %v860 = vlaneseq
    %v861 = vshrl.u32 %v860, 7
    %v862 = vsub.s32 1, %v861
    %v863 = vrot.slane %v813, %v862
    %v864 = vadd.f32 %v850, %v863
    %v865 = vadd.f32 %v854, %v863
    %v866 = vadd.f32 %v858, %v863
    %867 = vset.pattern.permute.xlu0 34
    %868 = vperm.xlu0 %867, %v772
    %v869 = vpop.permute.xlu0 %868
    %871 = vset.pattern.permute.xlu0 34
    %872 = vperm.xlu0 %871, %v777
    %v873 = vpop.permute.xlu0 %872
    %875 = vset.pattern.permute.xlu0 34
    %876 = vperm.xlu0 %875, %v782
    %v877 = vpop.permute.xlu0 %876
    %v879 = vlaneseq
    %v880 = vshrl.u32 %v879, 7
    %v881 = vsub.s32 2, %v880
    %v882 = vrot.slane %v813, %v881
    %v883 = vadd.f32 %v869, %v882
    %v884 = vadd.f32 %v873, %v882
    %v885 = vadd.f32 %v877, %v882
    %886 = vset.pattern.permute.xlu0 35
    %887 = vperm.xlu0 %886, %v772
    %v888 = vpop.permute.xlu0 %887
    %890 = vset.pattern.permute.xlu0 35
    %891 = vperm.xlu0 %890, %v777
    %v892 = vpop.permute.xlu0 %891
    %894 = vset.pattern.permute.xlu0 35
    %895 = vperm.xlu0 %894, %v782
    %v896 = vpop.permute.xlu0 %895
    %v898 = vlaneseq
    %v899 = vshrl.u32 %v898, 7
    %v900 = vsub.s32 3, %v899
    %v901 = vrot.slane %v813, %v900
    %v902 = vadd.f32 %v888, %v901
    %v903 = vadd.f32 %v892, %v901
    %v904 = vadd.f32 %v896, %v901
    %908 = vrot.lane.b32.xlu0 %v864, 24
    %v909 = vpop.permute.xlu0 %908
    %910 = vrot.lane.b32.xlu0 %v865, 24
    %v911 = vpop.permute.xlu0 %910
    %912 = vrot.lane.b32.xlu0 %v866, 24
    %v913 = vpop.permute.xlu0 %912
    %920 = vrot.lane.b32.xlu0 %v883, 48
    %v921 = vpop.permute.xlu0 %920
    %922 = vrot.lane.b32.xlu0 %v884, 48
    %v923 = vpop.permute.xlu0 %922
    %924 = vrot.lane.b32.xlu0 %v885, 48
    %v925 = vpop.permute.xlu0 %924
    %932 = vrot.lane.b32.xlu0 %v902, 72
    %v933 = vpop.permute.xlu0 %932
    %934 = vrot.lane.b32.xlu0 %v903, 72
    %v935 = vpop.permute.xlu0 %934
    %936 = vrot.lane.b32.xlu0 %v904, 72
    %v937 = vpop.permute.xlu0 %936
    %v941 = vsel %vm324, %v845, %v909
    %v942 = vsel %vm324, %v846, %v911
    %v943 = vsel %vm324, %v847, %v913
    %v944 = vsel %vm328, %v941, %v921
    %v945 = vsel %vm328, %v942, %v923
    %v946 = vsel %vm328, %v943, %v925
    %v947 = vsel %vm332, %v944, %v933
    %v948 = vsel %vm332, %v945, %v935
    %v949 = vsel %vm332, %v946, %v937
    %v950 = vmul.f32 %v947, 0.2
    %v951 = vmul.f32 %v948, 0.2
    %v952 = vmul.f32 %v949, 0.2
    %v953 = vmax.f32 %v947, %v950
    %v954 = vmax.f32 %v948, %v951
    %v955 = vmax.f32 %v949, %v952
    %v956 = vadd.f32 %v953, %v693
    %v957 = vadd.f32 %v954, %v694
    %v958 = vadd.f32 %v955, %v695
    %v959 = vsel %vm345, %v956, -inf
    %960 = vmax.xlane.f32.xlu0 %v959
    %v961 = vpop.xlane.xlu0 %960
    %v962 = vsel %vm345, %v957, -inf
    %963 = vmax.xlane.f32.xlu0 %v962
    %v964 = vpop.xlane.xlu0 %963
    %v965 = vsel %vm345, %v958, -inf
    %966 = vmax.xlane.f32.xlu0 %v965
    %v967 = vpop.xlane.xlu0 %966
    %v968 = vsub.f32 %v956, %v961
    %v969 = vsub.f32 %v957, %v964
    %v970 = vsub.f32 %v958, %v967
    %v971 = vmul.f32 %v968, 1.442695
    %v972 = vpow.pop %v971
    %v973 = vmul.f32 %v969, 1.442695
    %v974 = vpow.pop %v973
    %v975 = vmul.f32 %v970, 1.442695
    %v976 = vpow.pop %v975
    %v977 = vmul.f32 %v772, %v392
    %v978 = vmul.f32 %v777, %v392
    %v979 = vmul.f32 %v782, %v392
    %v980 = vmul.f32 %v772, %v396
    %v981 = vmul.f32 %v777, %v396
    %v982 = vmul.f32 %v782, %v396
    %v983 = vmul.f32 %v772, %v400
    %v984 = vmul.f32 %v777, %v400
    %v985 = vmul.f32 %v782, %v400
    %v986 = vmul.f32 %v772, %v404
    %v987 = vmul.f32 %v777, %v404
    %v988 = vmul.f32 %v782, %v404
    %v989 = vsel %vm78, %v977, %v434
    %v990 = vsel %vm78, %v978, %v436
    %v991 = vsel %vm78, %v979, %v438
    %v992 = vsel %vm78, %v980, %v440
    %v993 = vsel %vm78, %v981, %v442
    %v994 = vsel %vm78, %v982, %v444
    %v995 = vsel %vm78, %v983, %v446
    %v996 = vsel %vm78, %v984, %v448
    %v997 = vsel %vm78, %v985, %v450
    %v998 = vsel %vm78, %v986, %v452
    %v999 = vsel %vm78, %v987, %v454
    %v1000 = vsel %vm78, %v988, %v456
    %v1002 = vsel %vm345, %v972, 0
    %v1005 = vsel %vm345, %v974, 0
    %v1008 = vsel %vm345, %v976, 0
    %1010 = vmatprep.subr.mxu0 0.0
    %1011 = vmatpush1.msra.mxu0 0.0
    %1012 = vmatprep.subr.mxu0 0.0
    %1013 = vmatpush1.msra.mxu0 0.0
    %1014 = vmatprep.subr.mxu0 0.0
    %1015 = vmatpush1.msra.mxu0 0.0
    %1016 = vmatprep.subr.mxu0 0.0
    %1017 = vmatpush1.msra.mxu0 0.0
    %1018 = vmatprep.subr.mxu0 0.0
    %1019 = vmatpush1.msra.mxu0 %v1000
    %1020 = vmatprep.subr.mxu0 0.0
    %1021 = vmatpush1.msra.mxu0 %v999
    %1022 = vmatprep.subr.mxu0 0.0
    %1023 = vmatpush1.msra.mxu0 %v998
    %1024 = vmatprep.subr.mxu0 0.0
    %1025 = vmatpush1.msra.mxu0 %v997
    %1026 = vmatprep.subr.mxu0 0.0
    %1027 = vmatpush1.msra.mxu0 %v996
    %1028 = vmatprep.subr.mxu0 0.0
    %1029 = vmatpush1.msra.mxu0 %v995
    %1030 = vmatprep.subr.mxu0 0.0
    %1031 = vmatpush1.msra.mxu0 %v994
    %1032 = vmatprep.subr.mxu0 0.0
    %1033 = vmatpush1.msra.mxu0 %v993
    %1034 = vmatprep.subr.mxu0 0.0
    %1035 = vmatpush1.msra.mxu0 %v992
    %1036 = vmatprep.subr.mxu0 0.0
    %1037 = vmatpush1.msra.mxu0 %v991
    %1038 = vmatprep.subr.mxu0 0.0
    %1039 = vmatpush1.msra.mxu0 %v990
    %1040 = vmatprep.subr.mxu0 0.0
    %1041 = vmatpush1.msra.mxu0 %v989
    %1042 = vmatprep.subr.mxu0 0.0
    %1043 = vmatpush2.msra.mxu0 0.0
    %1044 = vmatprep.subr.mxu0 0.0
    %1045 = vmatpush2.msra.mxu0 0.0
    %1046 = vmatprep.subr.mxu0 0.0
    %1047 = vmatpush2.msra.mxu0 0.0
    %1048 = vmatprep.subr.mxu0 0.0
    %1049 = vmatpush2.msra.mxu0 0.0
    %1050 = vmatprep.subr.mxu0 0.0
    %1051 = vmatpush2.msra.mxu0 0.0
    %1052 = vmatprep.subr.mxu0 0.0
    %1053 = vmatpush2.msra.mxu0 0.0
    %1054 = vmatprep.subr.mxu0 0.0
    %1055 = vmatpush2.msra.mxu0 0.0
    %1056 = vmatprep.subr.mxu0 0.0
    %1057 = vmatpush2.msra.mxu0 0.0
    %1058 = vmatprep.subr.mxu0 0.0
    %1059 = vmatpush2.msra.mxu0 0.0
    %1060 = vmatprep.subr.mxu0 0.0
    %1061 = vmatpush2.msra.mxu0 0.0
    %1062 = vmatprep.subr.mxu0 0.0
    %1063 = vmatpush2.msra.mxu0 0.0
    %1064 = vmatprep.subr.mxu0 0.0
    %1065 = vmatpush2.msra.mxu0 0.0
    %1066 = vmatprep.subr.mxu0 0.0
    %1067 = vmatpush2.msra.mxu0 0.0
    %1068 = vmatprep.subr.mxu0 0.0
    %1069 = vmatpush2.msra.mxu0 0.0
    %1070 = vmatprep.subr.mxu0 0.0
    %1071 = vmatpush2.msra.mxu0 0.0
    %1072 = vmatprep.subr.mxu0 0.0
    %1073 = vmatpush2.msra.mxu0 0.0
    %1074 = vmatprep.mubr.f32.mxu0 0.0
    %1075 = vmatmul.mubr.f32.gmra.mxu0 %v1002
    %v1076 = vpop.f32.mrf.mxu0
    %v1077 = vadd.f32 0.0, %v1076
    %v1078 = vpop.f32.mrf.mxu0
    %1079 = vmatprep.mubr.f32.mxu0 0.0
    %1080 = vmatmul.mubr.f32.gmra.mxu0 %v1005
    %v1081 = vpop.f32.mrf.mxu0
    %v1082 = vadd.f32 0.0, %v1081
    %v1083 = vpop.f32.mrf.mxu0
    %1084 = vmatprep.mubr.f32.mxu0 0.0
    %1085 = vmatmul.mubr.f32.gmra.mxu0 %v1008
    %v1086 = vpop.f32.mrf.mxu0
    %v1087 = vadd.f32 0.0, %v1086
    %v1088 = vpop.f32.mrf.mxu0
    %1089 = vdwg.mxu0
    %v1090 = vrcp.pop %v1077
    %v1091 = vrcp.pop %v1082
    %v1092 = vrcp.pop %v1087
    %v1093 = vmul.f32 %v1077, %v1090
    %v1094 = vmul.f32 %v1082, %v1091
    %v1095 = vmul.f32 %v1087, %v1092
    %v1096 = vsub.f32 2.0, %v1093
    %v1097 = vsub.f32 2.0, %v1094
    %v1098 = vsub.f32 2.0, %v1095
    %v1099 = vmul.f32 %v1090, %v1096
    %v1100 = vmul.f32 %v1091, %v1097
    %v1101 = vmul.f32 %v1092, %v1098
    %1105 = vrot.lane.b32.xlu0 %v1099, 96
    %v1106 = vpop.permute.xlu0 %1105
    %1107 = vrot.lane.b32.xlu0 %v1100, 96
    %v1108 = vpop.permute.xlu0 %1107
    %1109 = vrot.lane.b32.xlu0 %v1101, 96
    %v1110 = vpop.permute.xlu0 %1109
    %v1111 = vsel %vm591, %v1106, 0
    %v1113 = vsel %vm591, %v1108, 0
    %v1115 = vsel %vm591, %v1110, 0
    %1117 = vmatprep.subr.mxu0 0.0
    %1118 = vmatpush1.msra.mxu0 0.0
    %1119 = vmatprep.subr.mxu0 0.0
    %1120 = vmatpush1.msra.mxu0 0.0
    %1121 = vmatprep.subr.mxu0 0.0
    %1122 = vmatpush1.msra.mxu0 0.0
    %1123 = vmatprep.subr.mxu0 0.0
    %1124 = vmatpush1.msra.mxu0 0.0
    %1125 = vmatprep.subr.mxu0 0.0
    %1126 = vmatpush1.msra.mxu0 0.0
    %1127 = vmatprep.subr.mxu0 0.0
    %1128 = vmatpush1.msra.mxu0 0.0
    %1129 = vmatprep.subr.mxu0 0.0
    %1130 = vmatpush1.msra.mxu0 0.0
    %1131 = vmatprep.subr.mxu0 0.0
    %1132 = vmatpush1.msra.mxu0 0.0
    %1133 = vmatprep.subr.mxu0 0.0
    %1134 = vmatpush1.msra.mxu0 0.0
    %1135 = vmatprep.subr.mxu0 0.0
    %1136 = vmatpush1.msra.mxu0 0.0
    %1137 = vmatprep.subr.mxu0 0.0
    %1138 = vmatpush1.msra.mxu0 0.0
    %1139 = vmatprep.subr.mxu0 0.0
    %1140 = vmatpush1.msra.mxu0 0.0
    %1141 = vmatprep.subr.mxu0 0.0
    %1142 = vmatpush1.msra.mxu0 0.0
    %1143 = vmatprep.subr.mxu0 0.0
    %1144 = vmatpush1.msra.mxu0 0.0
    %1145 = vmatprep.subr.mxu0 0.0
    %1146 = vmatpush1.msra.mxu0 0.0
    %1147 = vmatprep.subr.mxu0 0.0
    %1148 = vmatpush1.msra.mxu0 %v599
    %1149 = vmatprep.subr.mxu0 0.0
    %1150 = vmatpush2.msra.mxu0 0.0
    %1151 = vmatprep.subr.mxu0 0.0
    %1152 = vmatpush2.msra.mxu0 0.0
    %1153 = vmatprep.subr.mxu0 0.0
    %1154 = vmatpush2.msra.mxu0 0.0
    %1155 = vmatprep.subr.mxu0 0.0
    %1156 = vmatpush2.msra.mxu0 0.0
    %1157 = vmatprep.subr.mxu0 0.0
    %1158 = vmatpush2.msra.mxu0 0.0
    %1159 = vmatprep.subr.mxu0 0.0
    %1160 = vmatpush2.msra.mxu0 0.0
    %1161 = vmatprep.subr.mxu0 0.0
    %1162 = vmatpush2.msra.mxu0 0.0
    %1163 = vmatprep.subr.mxu0 0.0
    %1164 = vmatpush2.msra.mxu0 0.0
    %1165 = vmatprep.subr.mxu0 0.0
    %1166 = vmatpush2.msra.mxu0 0.0
    %1167 = vmatprep.subr.mxu0 0.0
    %1168 = vmatpush2.msra.mxu0 0.0
    %1169 = vmatprep.subr.mxu0 0.0
    %1170 = vmatpush2.msra.mxu0 0.0
    %1171 = vmatprep.subr.mxu0 0.0
    %1172 = vmatpush2.msra.mxu0 0.0
    %1173 = vmatprep.subr.mxu0 0.0
    %1174 = vmatpush2.msra.mxu0 0.0
    %1175 = vmatprep.subr.mxu0 0.0
    %1176 = vmatpush2.msra.mxu0 0.0
    %1177 = vmatprep.subr.mxu0 0.0
    %1178 = vmatpush2.msra.mxu0 0.0
    %1179 = vmatprep.subr.mxu0 0.0
    %1180 = vmatpush2.msra.mxu0 0.0
    %1181 = vmatprep.mubr.f32.mxu0 0.0
    %1182 = vmatmul.mubr.f32.gmra.mxu0 %v1111
    %v1183 = vpop.f32.mrf.mxu0
    %v1184 = vadd.f32 0.0, %v1183
    %v1185 = vpop.f32.mrf.mxu0
    %1186 = vmatprep.mubr.f32.mxu0 0.0
    %1187 = vmatmul.mubr.f32.gmra.mxu0 %v1113
    %v1188 = vpop.f32.mrf.mxu0
    %v1189 = vadd.f32 0.0, %v1188
    %v1190 = vpop.f32.mrf.mxu0
    %1191 = vmatprep.mubr.f32.mxu0 0.0
    %1192 = vmatmul.mubr.f32.gmra.mxu0 %v1115
    %v1193 = vpop.f32.mrf.mxu0
    %v1194 = vadd.f32 0.0, %v1193
    %v1195 = vpop.f32.mrf.mxu0
    %1196 = vdwg.mxu0
    %v1197 = vmul.f32 %v1077, %v1184
    %v1198 = vmul.f32 %v1082, %v1189
    %v1199 = vmul.f32 %v1087, %v1194
    %v1200 = vadd.f32 %v1197, %v688
    %v1201 = vadd.f32 %v1198, %v688
    %v1202 = vadd.f32 %v1199, %v688
    %v1203 = vld [vmem:[%s7] sm:$0xff]
    %v1205 = vsel %vm324, %v1203, 0
    %1207 = vmatprep.subr.mxu0 0.0
    %1208 = vmatpush1.msra.mxu0 0.0
    %1209 = vmatprep.subr.mxu0 0.0
    %1210 = vmatpush1.msra.mxu0 0.0
    %1211 = vmatprep.subr.mxu0 0.0
    %1212 = vmatpush1.msra.mxu0 0.0
    %1213 = vmatprep.subr.mxu0 0.0
    %1214 = vmatpush1.msra.mxu0 0.0
    %1215 = vmatprep.subr.mxu0 0.0
    %1216 = vmatpush1.msra.mxu0 0.0
    %1217 = vmatprep.subr.mxu0 0.0
    %1218 = vmatpush1.msra.mxu0 0.0
    %1219 = vmatprep.subr.mxu0 0.0
    %1220 = vmatpush1.msra.mxu0 0.0
    %1221 = vmatprep.subr.mxu0 0.0
    %1222 = vmatpush1.msra.mxu0 0.0
    %1223 = vmatprep.subr.mxu0 0.0
    %1224 = vmatpush1.msra.mxu0 0.0
    %1225 = vmatprep.subr.mxu0 0.0
    %1226 = vmatpush1.msra.mxu0 0.0
    %1227 = vmatprep.subr.mxu0 0.0
    %1228 = vmatpush1.msra.mxu0 0.0
    %1229 = vmatprep.subr.mxu0 0.0
    %1230 = vmatpush1.msra.mxu0 0.0
    %1231 = vmatprep.subr.mxu0 0.0
    %1232 = vmatpush1.msra.mxu0 0.0
    %1233 = vmatprep.subr.mxu0 0.0
    %1234 = vmatpush1.msra.mxu0 %v1202
    %1235 = vmatprep.subr.mxu0 0.0
    %1236 = vmatpush1.msra.mxu0 %v1201
    %1237 = vmatprep.subr.mxu0 0.0
    %1238 = vmatpush1.msra.mxu0 %v1200
    %1239 = vmatprep.subr.mxu0 0.0
    %1240 = vmatpush2.msra.mxu0 0.0
    %1241 = vmatprep.subr.mxu0 0.0
    %1242 = vmatpush2.msra.mxu0 0.0
    %1243 = vmatprep.subr.mxu0 0.0
    %1244 = vmatpush2.msra.mxu0 0.0
    %1245 = vmatprep.subr.mxu0 0.0
    %1246 = vmatpush2.msra.mxu0 0.0
    %1247 = vmatprep.subr.mxu0 0.0
    %1248 = vmatpush2.msra.mxu0 0.0
    %1249 = vmatprep.subr.mxu0 0.0
    %1250 = vmatpush2.msra.mxu0 0.0
    %1251 = vmatprep.subr.mxu0 0.0
    %1252 = vmatpush2.msra.mxu0 0.0
    %1253 = vmatprep.subr.mxu0 0.0
    %1254 = vmatpush2.msra.mxu0 0.0
    %1255 = vmatprep.subr.mxu0 0.0
    %1256 = vmatpush2.msra.mxu0 0.0
    %1257 = vmatprep.subr.mxu0 0.0
    %1258 = vmatpush2.msra.mxu0 0.0
    %1259 = vmatprep.subr.mxu0 0.0
    %1260 = vmatpush2.msra.mxu0 0.0
    %1261 = vmatprep.subr.mxu0 0.0
    %1262 = vmatpush2.msra.mxu0 0.0
    %1263 = vmatprep.subr.mxu0 0.0
    %1264 = vmatpush2.msra.mxu0 0.0
    %1265 = vmatprep.subr.mxu0 0.0
    %1266 = vmatpush2.msra.mxu0 0.0
    %1267 = vmatprep.subr.mxu0 0.0
    %1268 = vmatpush2.msra.mxu0 0.0
    %1269 = vmatprep.subr.mxu0 0.0
    %1270 = vmatpush2.msra.mxu0 0.0
    %1271 = vmatprep.mubr.f32.mxu0 0.0
    %1272 = vmatmul.mubr.f32.gmra.mxu0 %v1205
    %v1273 = vpop.f32.mrf.mxu0
    %v1274 = vadd.f32 0.0, %v1273
    %v1275 = vpop.f32.mrf.mxu0
    %1276 = vdwg.mxu0
    %1277 = vst.msk [vmem:[#allocation7] sm:$0xff] %vm78, %v1274
    // Predicated region
    $region42: #{ontology_embedding_forward.1} parent=1 // pred_check
      _
    $region43: #{ontology_embedding_forward.1} parent=1 // pred_check_branch
      %1279 = sbr.rel (0) target = $region45
    $region44: #{ontology_embedding_forward.1} parent=1 // pred_region
      %s1281 = ssub.s32 128, 128
      %1282 = vsyncadd [#allocation4], %s1281
      %s1284 = sshll.u32 [#allocation7], 4
      %s1285 = int_to_ptr.vmem [resolvable:$true] %s1284
      %1287 = dma.vmem_to_hbm [thread:$0]  %s1285, 128, %s8, [#allocation4]
    $region45: #{ontology_embedding_forward.1} parent=1 // pred_fallthru
      _
    // Predicated region
    $region46: #{ontology_embedding_forward.1} parent=1 // pred_check
      _
    $region47: #{ontology_embedding_forward.1} parent=1 // pred_check_branch
      %1289 = sbr.rel (0) target = $region49
    $region48: #{ontology_embedding_forward.1} parent=1 // pred_region
      %1290 = dma.done [#allocation4], 128
    $region49: #{ontology_embedding_forward.1} parent=1 // pred_fallthru
      _
    %1291 = vsyncpa [#allocation3], 1
    %1292 = vsyncpa [#allocation6], 1
    %1293 = vsyncpa [#allocation4], 1

</llo_original>
